<compile_context>
chip_gen: v6e
topology: v6e:2x2x1
jax: 0.10.0
libtpu: 0.0.40
codegen_flags: <defaults>
</compile_context>

<pallas_src>
import jax
import jax.numpy as jnp
from jax import lax
from jax.experimental import pallas as pl
from jax.experimental.pallas import tpu as pltpu


def _relu_conv1x1_sigmoid_kernel(x_ref, w_ref, b_ref, o_ref):
    # x_ref: (tm, Cin_p)      -- padded, flattened pixels
    # w_ref: (Cout_p, Cin_p)  -- weight kept in PyTorch (Cout, Cin) layout
    # b_ref: (1, Cout_p)
    # o_ref: (tm, Cout_p)
    x = jnp.maximum(x_ref[...], 0.0)                         # ReLU   (VPU)
    acc = lax.dot_general(                                   # 1x1 conv == matmul (MXU)
        x, w_ref[...],
        dimension_numbers=(((1,), (1,)), ((), ())),          # contract on Cin of both
        preferred_element_type=jnp.float32,
    )
    acc = acc + b_ref[...]                                   # bias broadcast over rows
    o_ref[...] = jax.nn.sigmoid(acc).astype(o_ref.dtype)     # Sigmoid (EUP)


def _round_up(v, m):
    return ((v + m - 1) // m) * m


def relu_conv1x1_sigmoid(x_nchw, weight, bias, *, tile_m=256):
    """x_nchw: (N, Cin, H, W), weight: (Cout, Cin, 1, 1), bias: (Cout,)."""
    n, cin, h, w = x_nchw.shape
    cout = weight.shape[0]
    m = n * h * w

    # Flatten to (M, Cin).  For 1x1 spatial this is a pure reshape (no transpose ops).
    if h == 1 and w == 1:
        x2d = x_nchw.reshape(m, cin)
    else:
        x2d = jnp.transpose(x_nchw, (0, 2, 3, 1)).reshape(m, cin)

    w2d = weight.reshape(cout, cin)            # (Cout, Cin) -- NO runtime transpose

    # Pad to TPU-friendly sizes: lanes (last dim) to 128, rows to sublane multiple of 8.
    cin_p = _round_up(cin, 128)                # 110 -> 128
    cout_p = _round_up(cout, 128)              # 440 -> 512
    tm = min(tile_m, _round_up(m, 8))
    m_p = _round_up(_round_up(m, 8), tm)

    x2d = jnp.pad(x2d, ((0, m_p - m), (0, cin_p - cin)))     # zero rows/cols are exact
    w2d = jnp.pad(w2d, ((0, cout_p - cout), (0, cin_p - cin)))
    b2d = jnp.pad(bias, (0, cout_p - cout)).reshape(1, cout_p)

    grid = (m_p // tm,)

    cost = pl.CostEstimate(
        flops=2 * m_p * cin_p * cout_p,
        bytes_accessed=4 * (m_p * cin_p + cout_p * cin_p + cout_p + m_p * cout_p),
        transcendentals=m_p * cout_p,
    )

    out2d = pl.pallas_call(
        _relu_conv1x1_sigmoid_kernel,
        out_shape=jax.ShapeDtypeStruct((m_p, cout_p), x_nchw.dtype),
        grid=grid,
        in_specs=[
            pl.BlockSpec((tm, cin_p), lambda i: (i, 0)),        # x rows tiled over grid
            pl.BlockSpec((cout_p, cin_p), lambda i: (0, 0)),    # W resident across grid
            pl.BlockSpec((1, cout_p), lambda i: (0, 0)),        # bias resident
        ],
        out_specs=pl.BlockSpec((tm, cout_p), lambda i: (i, 0)), # lane-dense (512) store
        compiler_params=pltpu.CompilerParams(
            dimension_semantics=("parallel",),                  # shard M across TCs (v7x)
        ),
        cost_estimate=cost,
    )(x2d, w2d, b2d)

    # Slice padding away and go back to NCHW.
    out2d = out2d[:m, :cout]
    if h == 1 and w == 1:
        return out2d.reshape(n, cout, h, w)
    return jnp.transpose(out2d.reshape(n, h, w, cout), (0, 3, 1, 2))


if __name__ == "__main__":
    key = jax.random.PRNGKey(0)
    k_x, k_w, k_b = jax.random.split(key, 3)

    N, CIN, COUT, H, W = 1, 110, 440, 1, 1

    # Deterministic synthetic parameters (match nn.Conv2d(110, 440, 1) shapes).
    x = jax.random.normal(k_x, (N, CIN, H, W), dtype=jnp.float32)
    fan_in = CIN * 1 * 1
    bound = 1.0 / (fan_in ** 0.5)
    weight = jax.random.uniform(k_w, (COUT, CIN, 1, 1), jnp.float32, -bound, bound)
    bias = jax.random.uniform(k_b, (COUT,), jnp.float32, -bound, bound)

    fn = jax.jit(relu_conv1x1_sigmoid)
    out = fn(x, weight, bias)
    out = jax.block_until_ready(out)

    # Sanity: compare against a plain-JAX reference of the same math.
    ref = jax.nn.sigmoid(
        jnp.einsum("nchw,oc->nohw", jnp.maximum(x, 0.0), weight.reshape(COUT, CIN))
        + bias.reshape(1, COUT, 1, 1)
    )
    assert out.shape == (N, COUT, H, W)
    assert jnp.allclose(out, ref, atol=1e-5, rtol=1e-5)

    print("KERNEL_OK")
</pallas_src>

<mosaic_0001>
module attributes {stable_mosaic.version = 11 : i64} {
  func.func @_relu_conv1x1_sigmoid_kernel(%arg0: i32, %arg1: memref<8x128xf32, #tpu.memory_space<vmem>>, %arg2: memref<512x128xf32, #tpu.memory_space<vmem>>, %arg3: memref<1x512xf32, #tpu.memory_space<vmem>>, %arg4: memref<8x512xf32, #tpu.memory_space<vmem>>) attributes {dimension_semantics = [#tpu.dimension_semantics<parallel>], iteration_bounds = array<i64: 1>, scalar_prefetch = 0 : i64, scratch_operands = 0 : i64, tpu.core_type = #tpu.core_type<tc>, window_params = [{transform_indices = @transform_0, window_bounds = array<i64: 8, 128>}, {pipeline_mode = #tpu.pipeline_mode<synchronous>, transform_indices = @transform_1, window_bounds = array<i64: 512, 128>}, {pipeline_mode = #tpu.pipeline_mode<synchronous>, transform_indices = @transform_2, window_bounds = array<i64: 1, 512>}, {transform_indices = @transform_3, window_bounds = array<i64: 8, 512>}]} {
    %c0 = arith.constant 0 : index
    %c0_0 = arith.constant 0 : index
    %0 = vector.load %arg1[%c0, %c0_0] : memref<8x128xf32, #tpu.memory_space<vmem>>, vector<8x128xf32>
    %cst = arith.constant 0.000000e+00 : f32
    %1 = vector.broadcast %cst : f32 to vector<8x128xf32>
    %2 = arith.maximumf %0, %1 : vector<8x128xf32>
    %c0_1 = arith.constant 0 : index
    %c0_2 = arith.constant 0 : index
    %3 = vector.load %arg2[%c0_1, %c0_2] : memref<512x128xf32, #tpu.memory_space<vmem>>, vector<512x128xf32>
    %cst_3 = arith.constant dense<0.000000e+00> : vector<8x512xf32>
    %4 = tpu.matmul %2, %3, %cst_3 {dimension_numbers = #tpu.dot_dimension_numbers<[1], [1], [0], [0], [0, 0, 1, 0], [], []>} : vector<8x128xf32>, vector<512x128xf32>, vector<8x512xf32> -> vector<8x512xf32>
    %c0_4 = arith.constant 0 : index
    %c0_5 = arith.constant 0 : index
    %5 = vector.load %arg3[%c0_4, %c0_5] : memref<1x512xf32, #tpu.memory_space<vmem>>, vector<1x512xf32>
    %6 = vector.broadcast %5 : vector<1x512xf32> to vector<8x512xf32>
    %7 = arith.addf %4, %6 : vector<8x512xf32>
    %8 = arith.negf %7 : vector<8x512xf32>
    %9 = math.exp %8 : vector<8x512xf32>
    %cst_6 = arith.constant 1.000000e+00 : f32
    %10 = vector.broadcast %cst_6 : f32 to vector<8x512xf32>
    %11 = arith.addf %10, %9 : vector<8x512xf32>
    %12 = arith.divf %10, %11 : vector<8x512xf32>
    %c0_7 = arith.constant 0 : index
    %c0_8 = arith.constant 0 : index
    %13 = vector.load %arg4[%c0_7, %c0_8] : memref<8x512xf32, #tpu.memory_space<vmem>>, vector<8x512xf32>
    tpu.vector_store %arg4[%c0_7, %c0_8], %12 {strides = array<i32>} : memref<8x512xf32, #tpu.memory_space<vmem>>, vector<8x512xf32>,
    return
  }
  func.func @transform_0(%arg0: i32) -> (i32, i32) {
    %c0_i32 = arith.constant 0 : i32
    %c0_i32_0 = arith.constant 0 : i32
    return %arg0, %c0_i32 : i32, i32
  }
  func.func @transform_1(%arg0: i32) -> (i32, i32) {
    %c0_i32 = arith.constant 0 : i32
    %c0_i32_0 = arith.constant 0 : i32
    %c0_i32_1 = arith.constant 0 : i32
    return %c0_i32, %c0_i32_0 : i32, i32
  }
  func.func @transform_2(%arg0: i32) -> (i32, i32) {
    %c0_i32 = arith.constant 0 : i32
    %c0_i32_0 = arith.constant 0 : i32
    %c0_i32_1 = arith.constant 0 : i32
    return %c0_i32, %c0_i32_0 : i32, i32
  }
  func.func @transform_3(%arg0: i32) -> (i32, i32) {
    %c0_i32 = arith.constant 0 : i32
    %c0_i32_0 = arith.constant 0 : i32
    return %arg0, %c0_i32 : i32, i32
  }
}

</mosaic_0001>

<llo_original>
// kernel: relu_conv1x1_sigmoid.1
$region0: #{relu_conv1x1_sigmoid.1}
  #allocation0 [shape = 'u32[]', space=smem, size = 0x4, offset = 0x4, fixed_abs, tag = 'smem constant byte address 0x4 - core index']
  #allocation1 [shape = 'u32[144,128]{1,0:T(1,128)}', space=vmem, size = 0x12000, scoped, tag = 'internal scratch']
  %s0 = inlined_call_operand.vmem [shape: f32[8,128], index: 0, kind: input, shape index: {}]
  %s1 = inlined_call_operand.vmem [shape: f32[512,128], index: 1, kind: input, shape index: {}]
  %s2 = inlined_call_operand.vmem [shape: f32[1,512], index: 2, kind: input, shape index: {}]
  %s3 = inlined_call_operand.vmem [shape: f32[8,512], index: 3, kind: output, shape index: {}]
  %s4 = sld [smem:[#allocation0]]
  $region22: #{relu_conv1x1_sigmoid.1} parent=0
    _
  %s6 = ssub.s32 1, %s4
  %s7 = scalar_select 0, %s6, %s4
  // Predicated region
  $region2: #{relu_conv1x1_sigmoid.1} parent=0 // pred_check
    _
  $region3: #{relu_conv1x1_sigmoid.1} parent=0 // pred_check_branch
    %9 = sbr.rel (0) target = $region5
  $region4: #{relu_conv1x1_sigmoid.1} parent=0 // pred_region
    _
  $region5: #{relu_conv1x1_sigmoid.1} parent=0 // pred_fallthru
    _
  // Predicated region
  $region6: #{relu_conv1x1_sigmoid.1} parent=0 // pred_check
    _
  $region7: #{relu_conv1x1_sigmoid.1} parent=0 // pred_check_branch
    %11 = sbr.rel (0) target = $region9
  $region8: #{relu_conv1x1_sigmoid.1} parent=0 // pred_region
    _
  $region9: #{relu_conv1x1_sigmoid.1} parent=0 // pred_fallthru
    _
  // Predicated region
  $region10: #{relu_conv1x1_sigmoid.1} parent=0 // pred_check
    _
  $region11: #{relu_conv1x1_sigmoid.1} parent=0 // pred_check_branch
    %13 = sbr.rel (0) target = $region13
  $region12: #{relu_conv1x1_sigmoid.1} parent=0 // pred_region
    _
  $region13: #{relu_conv1x1_sigmoid.1} parent=0 // pred_fallthru
    _
  %v14 = vld [vmem:[%s0] sm:$0xff]
  %v15 = vmax.f32 %v14, 0.0
  %v16 = vld [vmem:[%s1] sm:$0xff]
  %v17 = vld [vmem:[%s1 + $0x8] sm:$0xff]
  %v18 = vld [vmem:[%s1 + $0x10] sm:$0xff]
  %v19 = vld [vmem:[%s1 + $0x18] sm:$0xff]
  %v20 = vld [vmem:[%s1 + $0x20] sm:$0xff]
  %v21 = vld [vmem:[%s1 + $0x28] sm:$0xff]
  %v22 = vld [vmem:[%s1 + $0x30] sm:$0xff]
  %v23 = vld [vmem:[%s1 + $0x38] sm:$0xff]
  %v24 = vld [vmem:[%s1 + $0x40] sm:$0xff]
  %v25 = vld [vmem:[%s1 + $0x48] sm:$0xff]
  %v26 = vld [vmem:[%s1 + $0x50] sm:$0xff]
  %v27 = vld [vmem:[%s1 + $0x58] sm:$0xff]
  %v28 = vld [vmem:[%s1 + $0x60] sm:$0xff]
  %v29 = vld [vmem:[%s1 + $0x68] sm:$0xff]
  %v30 = vld [vmem:[%s1 + $0x70] sm:$0xff]
  %v31 = vld [vmem:[%s1 + $0x78] sm:$0xff]
  %v32 = vld [vmem:[%s1 + $0x80] sm:$0xff]
  %v33 = vld [vmem:[%s1 + $0x88] sm:$0xff]
  %v34 = vld [vmem:[%s1 + $0x90] sm:$0xff]
  %v35 = vld [vmem:[%s1 + $0x98] sm:$0xff]
  %v36 = vld [vmem:[%s1 + $0xa0] sm:$0xff]
  %v37 = vld [vmem:[%s1 + $0xa8] sm:$0xff]
  %v38 = vld [vmem:[%s1 + $0xb0] sm:$0xff]
  %v39 = vld [vmem:[%s1 + $0xb8] sm:$0xff]
  %v40 = vld [vmem:[%s1 + $0xc0] sm:$0xff]
  %v41 = vld [vmem:[%s1 + $0xc8] sm:$0xff]
  %v42 = vld [vmem:[%s1 + $0xd0] sm:$0xff]
  %v43 = vld [vmem:[%s1 + $0xd8] sm:$0xff]
  %v44 = vld [vmem:[%s1 + $0xe0] sm:$0xff]
  %v45 = vld [vmem:[%s1 + $0xe8] sm:$0xff]
  %v46 = vld [vmem:[%s1 + $0xf0] sm:$0xff]
  %v47 = vld [vmem:[%s1 + $0xf8] sm:$0xff]
  %v48 = vld [vmem:[%s1 + $0x100] sm:$0xff]
  %v49 = vld [vmem:[%s1 + $0x108] sm:$0xff]
  %v50 = vld [vmem:[%s1 + $0x110] sm:$0xff]
  %v51 = vld [vmem:[%s1 + $0x118] sm:$0xff]
  %v52 = vld [vmem:[%s1 + $0x120] sm:$0xff]
  %v53 = vld [vmem:[%s1 + $0x128] sm:$0xff]
  %v54 = vld [vmem:[%s1 + $0x130] sm:$0xff]
  %v55 = vld [vmem:[%s1 + $0x138] sm:$0xff]
  %v56 = vld [vmem:[%s1 + $0x140] sm:$0xff]
  %v57 = vld [vmem:[%s1 + $0x148] sm:$0xff]
  %v58 = vld [vmem:[%s1 + $0x150] sm:$0xff]
  %v59 = vld [vmem:[%s1 + $0x158] sm:$0xff]
  %v60 = vld [vmem:[%s1 + $0x160] sm:$0xff]
  %v61 = vld [vmem:[%s1 + $0x168] sm:$0xff]
  %v62 = vld [vmem:[%s1 + $0x170] sm:$0xff]
  %v63 = vld [vmem:[%s1 + $0x178] sm:$0xff]
  %v64 = vld [vmem:[%s1 + $0x180] sm:$0xff]
  %v65 = vld [vmem:[%s1 + $0x188] sm:$0xff]
  %v66 = vld [vmem:[%s1 + $0x190] sm:$0xff]
  %v67 = vld [vmem:[%s1 + $0x198] sm:$0xff]
  %v68 = vld [vmem:[%s1 + $0x1a0] sm:$0xff]
  %v69 = vld [vmem:[%s1 + $0x1a8] sm:$0xff]
  %v70 = vld [vmem:[%s1 + $0x1b0] sm:$0xff]
  %v71 = vld [vmem:[%s1 + $0x1b8] sm:$0xff]
  %v72 = vld [vmem:[%s1 + $0x1c0] sm:$0xff]
  %v73 = vld [vmem:[%s1 + $0x1c8] sm:$0xff]
  %v74 = vld [vmem:[%s1 + $0x1d0] sm:$0xff]
  %v75 = vld [vmem:[%s1 + $0x1d8] sm:$0xff]
  %v76 = vld [vmem:[%s1 + $0x1e0] sm:$0xff]
  %v77 = vld [vmem:[%s1 + $0x1e8] sm:$0xff]
  %v78 = vld [vmem:[%s1 + $0x1f0] sm:$0xff]
  %v79 = vld [vmem:[%s1 + $0x1f8] sm:$0xff]
  %v80 = vld [vmem:[%s2] sm:$0xf]
  %v82 = vlaneseq
  %v83 = vshrl.u32 %v82, 7
  %v84 = vsub.s32 0, %v83
  %v85 = vrot.slane %v80, %v84
  %v86 = vlaneseq
  %v87 = vshrl.u32 %v86, 7
  %v88 = vsub.s32 1, %v87
  %v89 = vrot.slane %v80, %v88
  %v90 = vlaneseq
  %v91 = vshrl.u32 %v90, 7
  %v92 = vsub.s32 2, %v91
  %v93 = vrot.slane %v80, %v92
  %v94 = vlaneseq
  %v95 = vshrl.u32 %v94, 7
  %v96 = vsub.s32 3, %v95
  %v97 = vrot.slane %v80, %v96
  %102 = vmatprep.subr.mxu0 0.0
  %103 = vmatpush1.xpose.msra.mxu0 %v31
  %104 = vmatprep.subr.mxu0 0.0
  %105 = vmatpush1.xpose.msra.mxu0 %v30
  %106 = vmatprep.subr.mxu0 0.0
  %107 = vmatpush1.xpose.msra.mxu0 %v29
  %108 = vmatprep.subr.mxu0 0.0
  %109 = vmatpush1.xpose.msra.mxu0 %v28
  %110 = vmatprep.subr.mxu0 0.0
  %111 = vmatpush1.xpose.msra.mxu0 %v27
  %112 = vmatprep.subr.mxu0 0.0
  %113 = vmatpush1.xpose.msra.mxu0 %v26
  %114 = vmatprep.subr.mxu0 0.0
  %115 = vmatpush1.xpose.msra.mxu0 %v25
  %116 = vmatprep.subr.mxu0 0.0
  %117 = vmatpush1.xpose.msra.mxu0 %v24
  %118 = vmatprep.subr.mxu0 0.0
  %119 = vmatpush1.xpose.msra.mxu0 %v23
  %120 = vmatprep.subr.mxu0 0.0
  %121 = vmatpush1.xpose.msra.mxu0 %v22
  %122 = vmatprep.subr.mxu0 0.0
  %123 = vmatpush1.xpose.msra.mxu0 %v21
  %124 = vmatprep.subr.mxu0 0.0
  %125 = vmatpush1.xpose.msra.mxu0 %v20
  %126 = vmatprep.subr.mxu0 0.0
  %127 = vmatpush1.xpose.msra.mxu0 %v19
  %128 = vmatprep.subr.mxu0 0.0
  %129 = vmatpush1.xpose.msra.mxu0 %v18
  %130 = vmatprep.subr.mxu0 0.0
  %131 = vmatpush1.xpose.msra.mxu0 %v17
  %132 = vmatprep.subr.mxu0 0.0
  %133 = vmatpush1.xpose.msra.mxu0 %v16
  %134 = vmatprep.subr.mxu0 0.0
  %135 = vmatpush2.xpose.msra.mxu0 %v47
  %136 = vmatprep.subr.mxu0 0.0
  %137 = vmatpush2.xpose.msra.mxu0 %v46
  %138 = vmatprep.subr.mxu0 0.0
  %139 = vmatpush2.xpose.msra.mxu0 %v45
  %140 = vmatprep.subr.mxu0 0.0
  %141 = vmatpush2.xpose.msra.mxu0 %v44
  %142 = vmatprep.subr.mxu0 0.0
  %143 = vmatpush2.xpose.msra.mxu0 %v43
  %144 = vmatprep.subr.mxu0 0.0
  %145 = vmatpush2.xpose.msra.mxu0 %v42
  %146 = vmatprep.subr.mxu0 0.0
  %147 = vmatpush2.xpose.msra.mxu0 %v41
  %148 = vmatprep.subr.mxu0 0.0
  %149 = vmatpush2.xpose.msra.mxu0 %v40
  %150 = vmatprep.subr.mxu0 0.0
  %151 = vmatpush2.xpose.msra.mxu0 %v39
  %152 = vmatprep.subr.mxu0 0.0
  %153 = vmatpush2.xpose.msra.mxu0 %v38
  %154 = vmatprep.subr.mxu0 0.0
  %155 = vmatpush2.xpose.msra.mxu0 %v37
  %156 = vmatprep.subr.mxu0 0.0
  %157 = vmatpush2.xpose.msra.mxu0 %v36
  %158 = vmatprep.subr.mxu0 0.0
  %159 = vmatpush2.xpose.msra.mxu0 %v35
  %160 = vmatprep.subr.mxu0 0.0
  %161 = vmatpush2.xpose.msra.mxu0 %v34
  %162 = vmatprep.subr.mxu0 0.0
  %163 = vmatpush2.xpose.msra.mxu0 %v33
  %164 = vmatprep.subr.mxu0 0.0
  %165 = vmatpush2.xpose.msra.mxu0 %v32
  %166 = vmatprep.mubr.f32.mxu0 0.0
  %167 = vmatmul.mubr.f32.gmra.mxu0 %v15
  %v168 = vpop.f32.mrf.mxu0
  %v169 = vadd.f32 %v85, %v168
  %v170 = vpop.f32.mrf.mxu0
  %v171 = vadd.f32 %v89, %v170
  %172 = vdwg.mxu0
  %173 = vmatprep.subr.mxu0 0.0
  %174 = vmatpush1.xpose.msra.mxu0 %v63
  %175 = vmatprep.subr.mxu0 0.0
  %176 = vmatpush1.xpose.msra.mxu0 %v62
  %177 = vmatprep.subr.mxu0 0.0
  %178 = vmatpush1.xpose.msra.mxu0 %v61
  %179 = vmatprep.subr.mxu0 0.0
  %180 = vmatpush1.xpose.msra.mxu0 %v60
  %181 = vmatprep.subr.mxu0 0.0
  %182 = vmatpush1.xpose.msra.mxu0 %v59
  %183 = vmatprep.subr.mxu0 0.0
  %184 = vmatpush1.xpose.msra.mxu0 %v58
  %185 = vmatprep.subr.mxu0 0.0
  %186 = vmatpush1.xpose.msra.mxu0 %v57
  %187 = vmatprep.subr.mxu0 0.0
  %188 = vmatpush1.xpose.msra.mxu0 %v56
  %189 = vmatprep.subr.mxu0 0.0
  %190 = vmatpush1.xpose.msra.mxu0 %v55
  %191 = vmatprep.subr.mxu0 0.0
  %192 = vmatpush1.xpose.msra.mxu0 %v54
  %193 = vmatprep.subr.mxu0 0.0
  %194 = vmatpush1.xpose.msra.mxu0 %v53
  %195 = vmatprep.subr.mxu0 0.0
  %196 = vmatpush1.xpose.msra.mxu0 %v52
  %197 = vmatprep.subr.mxu0 0.0
  %198 = vmatpush1.xpose.msra.mxu0 %v51
  %199 = vmatprep.subr.mxu0 0.0
  %200 = vmatpush1.xpose.msra.mxu0 %v50
  %201 = vmatprep.subr.mxu0 0.0
  %202 = vmatpush1.xpose.msra.mxu0 %v49
  %203 = vmatprep.subr.mxu0 0.0
  %204 = vmatpush1.xpose.msra.mxu0 %v48
  %205 = vmatprep.subr.mxu0 0.0
  %206 = vmatpush2.xpose.msra.mxu0 %v79
  %207 = vmatprep.subr.mxu0 0.0
  %208 = vmatpush2.xpose.msra.mxu0 %v78
  %209 = vmatprep.subr.mxu0 0.0
  %210 = vmatpush2.xpose.msra.mxu0 %v77
  %211 = vmatprep.subr.mxu0 0.0
  %212 = vmatpush2.xpose.msra.mxu0 %v76
  %213 = vmatprep.subr.mxu0 0.0
  %214 = vmatpush2.xpose.msra.mxu0 %v75
  %215 = vmatprep.subr.mxu0 0.0
  %216 = vmatpush2.xpose.msra.mxu0 %v74
  %217 = vmatprep.subr.mxu0 0.0
  %218 = vmatpush2.xpose.msra.mxu0 %v73
  %219 = vmatprep.subr.mxu0 0.0
  %220 = vmatpush2.xpose.msra.mxu0 %v72
  %221 = vmatprep.subr.mxu0 0.0
  %222 = vmatpush2.xpose.msra.mxu0 %v71
  %223 = vmatprep.subr.mxu0 0.0
  %224 = vmatpush2.xpose.msra.mxu0 %v70
  %225 = vmatprep.subr.mxu0 0.0
  %226 = vmatpush2.xpose.msra.mxu0 %v69
  %227 = vmatprep.subr.mxu0 0.0
  %228 = vmatpush2.xpose.msra.mxu0 %v68
  %229 = vmatprep.subr.mxu0 0.0
  %230 = vmatpush2.xpose.msra.mxu0 %v67
  %231 = vmatprep.subr.mxu0 0.0
  %232 = vmatpush2.xpose.msra.mxu0 %v66
  %233 = vmatprep.subr.mxu0 0.0
  %234 = vmatpush2.xpose.msra.mxu0 %v65
  %235 = vmatprep.subr.mxu0 0.0
  %236 = vmatpush2.xpose.msra.mxu0 %v64
  %237 = vmatprep.mubr.f32.mxu0 0.0
  %238 = vmatmul.mubr.f32.gmra.mxu0 %v15
  %v239 = vpop.f32.mrf.mxu0
  %v240 = vadd.f32 %v93, %v239
  %v241 = vpop.f32.mrf.mxu0
  %v242 = vadd.f32 %v97, %v241
  %243 = vdwg.mxu0
  %v244 = vxor.u32 %v169, 2147483648
  %v245 = vxor.u32 %v171, 2147483648
  %v246 = vxor.u32 %v240, 2147483648
  %v247 = vxor.u32 %v242, 2147483648
  %v248 = vmul.f32 %v244, 1.442695
  %v249 = vpow.pop %v248
  %v250 = vmul.f32 %v245, 1.442695
  %v251 = vpow.pop %v250
  %v252 = vmul.f32 %v246, 1.442695
  %v253 = vpow.pop %v252
  %v254 = vmul.f32 %v247, 1.442695
  %v255 = vpow.pop %v254
  %v256 = vadd.f32 %v249, 1.0
  %v257 = vadd.f32 %v251, 1.0
  %v258 = vadd.f32 %v253, 1.0
  %v259 = vadd.f32 %v255, 1.0
  %v260 = vrcp.pop %v256
  %v261 = vmul.f32 1.0, %v260
  %v262 = vrcp.pop %v257
  %v263 = vmul.f32 1.0, %v262
  %v264 = vrcp.pop %v258
  %v265 = vmul.f32 1.0, %v264
  %v266 = vrcp.pop %v259
  %v267 = vmul.f32 1.0, %v266
  %268 = vst [vmem:[%s3] sm:$0xff] %v261
  %269 = vst [vmem:[%s3 + $0x8] sm:$0xff] %v263
  %270 = vst [vmem:[%s3 + $0x10] sm:$0xff] %v265
  %271 = vst [vmem:[%s3 + $0x18] sm:$0xff] %v267
  // Predicated region
  $region14: #{relu_conv1x1_sigmoid.1} parent=0 // pred_check
    _
  $region15: #{relu_conv1x1_sigmoid.1} parent=0 // pred_check_branch
    %273 = sbr.rel (0) target = $region17
  $region16: #{relu_conv1x1_sigmoid.1} parent=0 // pred_region
    _
  $region17: #{relu_conv1x1_sigmoid.1} parent=0 // pred_fallthru
    _
  // Predicated region
  $region18: #{relu_conv1x1_sigmoid.1} parent=0 // pred_check
    _
  $region19: #{relu_conv1x1_sigmoid.1} parent=0 // pred_check_branch
    %275 = sbr.rel (0) target = $region21
  $region20: #{relu_conv1x1_sigmoid.1} parent=0 // pred_region
    _
  $region21: #{relu_conv1x1_sigmoid.1} parent=0 // pred_fallthru
    _

</llo_original>
